<compile_context>
chip_gen: v5e
topology: v5e:2x2
jax: 0.10.0
libtpu: 0.0.40
codegen_flags: <defaults>
</compile_context>

<pallas_src>
import jax
import jax.numpy as jnp
from jax.experimental import pallas as pl
from jax.experimental.pallas import tpu as pltpu

_HIDDEN = 32
_NEG_SLOPE = 0.2


def _round_up(a, b):
    return (a + b - 1) // b * b


def _mlp_kernel(x_ref,
                w0_ref, b0_ref,
                w1_ref, b1_ref,
                w2_ref, b2_ref,
                w3t_ref, b3_ref,
                o_ref):
    """Fused forward pass for one batch tile.

    x_ref   : (TM, D)   compute dtype (f32 or bf16), batch on sublanes
    w*_ref  : weights in compute dtype; w3t is the transposed output layer (1, H)
    b*_ref  : biases, float32
    o_ref   : (1, TM)   float32 -- batch mapped onto the lane axis (lane-dense store)
    """
    def leaky_relu(h):
        return jnp.where(h > 0, h, _NEG_SLOPE * h)

    cdt = w0_ref.dtype  # compute dtype fed to the MXU

    # hidden0/1/2: Linear + LeakyReLU(0.2) (+ Dropout == identity in eval).
    # Dots accumulate in f32; elementwise math stays f32 (safe on v5e's VPU/EUP).
    h = jnp.dot(x_ref[...], w0_ref[...], preferred_element_type=jnp.float32) + b0_ref[...]
    h = leaky_relu(h)
    h = jnp.dot(h.astype(cdt), w1_ref[...], preferred_element_type=jnp.float32) + b1_ref[...]
    h = leaky_relu(h)
    h = jnp.dot(h.astype(cdt), w2_ref[...], preferred_element_type=jnp.float32) + b2_ref[...]
    h = leaky_relu(h)

    # out: Linear(32, 1) + Sigmoid, computed as (1,H) x (TM,H)^T -> (1, TM) so the
    # result (and its writeback) is lane-dense rather than a (TM,1) masked column.
    logits = jax.lax.dot_general(
        w3t_ref[...], h.astype(cdt),
        dimension_numbers=(((1,), (1,)), ((), ())),
        preferred_element_type=jnp.float32) + b3_ref[...]
    o_ref[...] = jax.nn.sigmoid(logits)


def precision_booster_forward(x, params, *, compute_dtype=None, tm=None):
    """Eval-mode forward of PrecisionBooster.

    x      : (N, D) float array.
    params : dict with w0..w3 of shape (in, out) and b0..b3 of shape (1, out).
    compute_dtype : dtype fed to the MXU (float32 or bfloat16). Biases and all
        elementwise math stay float32. Supplying x already in bf16 avoids the
        wrapper-side cast pass and halves the dominant HBM stream.
    Returns (N, 1) float32.
    """
    N, D = x.shape
    if compute_dtype is None:
        compute_dtype = x.dtype if x.dtype == jnp.bfloat16 else jnp.float32
    compute_dtype = jnp.dtype(compute_dtype)
    itemsize = compute_dtype.itemsize
    H = params["w0"].shape[1]

    # ---- batch-tile selection --------------------------------------------------
    # Budget the double-buffered x tile to ~8 MiB per buffer so the kernel stays
    # well inside the 32 MiB vmem limit below on every generation (incl. v7x).
    auto_tm = tm is None
    if auto_tm:
        budget_per_buf = 8 * 1024 * 1024
        tm = (budget_per_buf // max(1, D * itemsize)) // 128 * 128
        tm = max(128, min(2048, int(tm)))
    tm = int(max(128, _round_up(int(tm), 128)))      # lane-dense output + sublane alignment
    tm = min(tm, _round_up(N, 128))                  # don't exceed the (padded) batch
    if auto_tm and _round_up(N, 128) >= 256:
        # Keep >=2 grid steps so v7x's two TensorCores both get work.
        tm = min(tm, max(128, (_round_up(N, 128) // 2) // 128 * 128))

    N_pad = _round_up(N, tm)
    grid = (N_pad // tm,)

    # ---- operand preparation ----------------------------------------------------
    xc = x.astype(compute_dtype)
    if N_pad != N:
        xc = jnp.pad(xc, ((0, N_pad - N), (0, 0)))   # padded rows are computed then dropped

    w0 = params["w0"].astype(compute_dtype)
    w1 = params["w1"].astype(compute_dtype)
    w2 = params["w2"].astype(compute_dtype)
    w3t = params["w3"].T.astype(compute_dtype)       # (1, H): trans_b form -> lane-dense out
    b0 = params["b0"].astype(jnp.float32)
    b1 = params["b1"].astype(jnp.float32)
    b2 = params["b2"].astype(jnp.float32)
    b3 = params["b3"].astype(jnp.float32)            # (1, 1)

    def whole(arr):
        nd = arr.ndim
        return pl.BlockSpec(arr.shape, lambda i, _nd=nd: (0,) * _nd)

    flops = 2 * N_pad * (D * H + 2 * H * H + H)
    bytes_accessed = (N_pad * D * itemsize + N_pad * 4
                      + (D * H + 2 * H * H + H) * itemsize + (3 * H + 1) * 4)
    cost = pl.CostEstimate(flops=int(flops), transcendentals=int(N_pad),
                           bytes_accessed=int(bytes_accessed))

    out = pl.pallas_call(
        _mlp_kernel,
        out_shape=jax.ShapeDtypeStruct((1, N_pad), jnp.float32),
        grid_spec=pltpu.PrefetchScalarGridSpec(
            num_scalar_prefetch=0,
            grid=grid,
            in_specs=[
                # x batch tile; weights/biases reuse the same (only) block every step.
                # (pipeline_mode=pl.Buffered(3) on this spec is an option if VMEM
                #  pressure ever forces smaller tiles -- sweep before enabling.)
                pl.BlockSpec((tm, D), lambda i: (i, 0)),
                whole(w0), whole(b0),
                whole(w1), whole(b1),
                whole(w2), whole(b2),
                whole(w3t), whole(b3),
            ],
            out_specs=pl.BlockSpec((1, tm), lambda i: (0, i)),
        ),
        compiler_params=pltpu.CompilerParams(
            dimension_semantics=("parallel",),
            vmem_limit_bytes=32 * 1024 * 1024),
        cost_estimate=cost,
    )(xc, w0, b0, w1, b1, w2, b2, w3t, b3)

    return out.reshape(N_pad, 1)[:N]


def init_params(input_dim, hidden=_HIDDEN, out_dim=1, seed=0):
    """Deterministic init mimicking nn.Linear's default U[-1/sqrt(fan_in), 1/sqrt(fan_in)]."""
    key = jax.random.PRNGKey(seed)
    dims = [(input_dim, hidden), (hidden, hidden), (hidden, hidden), (hidden, out_dim)]
    params = {}
    for idx, (fan_in, fan_out) in enumerate(dims):
        key, kw, kb = jax.random.split(key, 3)
        bound = 1.0 / jnp.sqrt(jnp.float32(fan_in))
        params[f"w{idx}"] = jax.random.uniform(kw, (fan_in, fan_out), jnp.float32, -bound, bound)
        params[f"b{idx}"] = jax.random.uniform(kb, (1, fan_out), jnp.float32, -bound, bound)
    return params


def reference_forward(x, params):
    """Pure-JAX reference (eval-mode dropout == identity)."""
    h = x
    for idx in range(3):
        h = h @ params[f"w{idx}"] + params[f"b{idx}"]
        h = jnp.where(h > 0, h, _NEG_SLOPE * h)
    logits = h @ params["w3"] + params["b3"]
    return jax.nn.sigmoid(logits)


if __name__ == "__main__":
    input_dim = 16
    batch = 8

    key = jax.random.PRNGKey(0)
    kx, kx2 = jax.random.split(key)
    x = jax.random.normal(kx, (batch, input_dim), dtype=jnp.float32)
    params = init_params(input_dim, seed=0)

    # f32 path, single tile (small batch is padded to one 128-row tile).
    y = jax.block_until_ready(precision_booster_forward(x, params))
    y_ref = reference_forward(x, params)
    assert y.shape == (batch, 1)
    assert jnp.allclose(y, y_ref, atol=1e-4, rtol=1e-4), "f32 kernel mismatch vs reference"

    # Multi-tile grid + non-divisible batch (remainder padding), explicit tile size.
    x2 = jax.random.normal(kx2, (300, input_dim), dtype=jnp.float32)
    y2 = jax.block_until_ready(precision_booster_forward(x2, params, tm=128))
    y2_ref = reference_forward(x2, params)
    assert y2.shape == (300, 1)
    assert jnp.allclose(y2, y2_ref, atol=1e-4, rtol=1e-4), "multi-tile kernel mismatch"

    # bf16 compute path (MXU operands bf16, elementwise math f32).
    y_bf16 = jax.block_until_ready(
        precision_booster_forward(x2, params, compute_dtype=jnp.bfloat16))
    assert y_bf16.shape == (300, 1)
    assert jnp.allclose(y_bf16, y2_ref, atol=3e-2), "bf16 kernel mismatch vs reference"

    print("KERNEL_OK")
</pallas_src>

<mosaic_0001>
module attributes {stable_mosaic.version = 11 : i64} {
  func.func @_mlp_kernel(%arg0: i32, %arg1: memref<128x16xf32, #tpu.memory_space<vmem>>, %arg2: memref<16x32xf32, #tpu.memory_space<vmem>>, %arg3: memref<1x32xf32, #tpu.memory_space<vmem>>, %arg4: memref<32x32xf32, #tpu.memory_space<vmem>>, %arg5: memref<1x32xf32, #tpu.memory_space<vmem>>, %arg6: memref<32x32xf32, #tpu.memory_space<vmem>>, %arg7: memref<1x32xf32, #tpu.memory_space<vmem>>, %arg8: memref<1x32xf32, #tpu.memory_space<vmem>>, %arg9: memref<1x1xf32, #tpu.memory_space<vmem>>, %arg10: memref<1x128xf32, #tpu.memory_space<vmem>>) attributes {dimension_semantics = [#tpu.dimension_semantics<parallel>], iteration_bounds = array<i64: 1>, scalar_prefetch = 0 : i64, scratch_operands = 0 : i64, tpu.core_type = #tpu.core_type<tc>, window_params = [{transform_indices = @transform_0, window_bounds = array<i64: 128, 16>}, {pipeline_mode = #tpu.pipeline_mode<synchronous>, transform_indices = @transform_1, window_bounds = array<i64: 16, 32>}, {pipeline_mode = #tpu.pipeline_mode<synchronous>, transform_indices = @transform_2, window_bounds = array<i64: 1, 32>}, {pipeline_mode = #tpu.pipeline_mode<synchronous>, transform_indices = @transform_3, window_bounds = array<i64: 32, 32>}, {pipeline_mode = #tpu.pipeline_mode<synchronous>, transform_indices = @transform_4, window_bounds = array<i64: 1, 32>}, {pipeline_mode = #tpu.pipeline_mode<synchronous>, transform_indices = @transform_5, window_bounds = array<i64: 32, 32>}, {pipeline_mode = #tpu.pipeline_mode<synchronous>, transform_indices = @transform_6, window_bounds = array<i64: 1, 32>}, {pipeline_mode = #tpu.pipeline_mode<synchronous>, transform_indices = @transform_7, window_bounds = array<i64: 1, 32>}, {pipeline_mode = #tpu.pipeline_mode<synchronous>, transform_indices = @transform_8, window_bounds = array<i64: 1, 1>}, {transform_indices = @transform_9, window_bounds = array<i64: 1, 128>}]} {
    %c0 = arith.constant 0 : index
    %c0_0 = arith.constant 0 : index
    %0 = vector.load %arg1[%c0, %c0_0] : memref<128x16xf32, #tpu.memory_space<vmem>>, vector<128x16xf32>
    %c0_1 = arith.constant 0 : index
    %c0_2 = arith.constant 0 : index
    %1 = vector.load %arg2[%c0_1, %c0_2] : memref<16x32xf32, #tpu.memory_space<vmem>>, vector<16x32xf32>
    %cst = arith.constant dense<0.000000e+00> : vector<128x32xf32>
    %2 = tpu.matmul %0, %1, %cst {dimension_numbers = #tpu.dot_dimension_numbers<[1], [0], [0], [1], [0, 0, 1, 1], [], []>} : vector<128x16xf32>, vector<16x32xf32>, vector<128x32xf32> -> vector<128x32xf32>
    %c0_3 = arith.constant 0 : index
    %c0_4 = arith.constant 0 : index
    %3 = vector.load %arg3[%c0_3, %c0_4] : memref<1x32xf32, #tpu.memory_space<vmem>>, vector<1x32xf32>
    %4 = vector.broadcast %3 : vector<1x32xf32> to vector<128x32xf32>
    %5 = arith.addf %2, %4 : vector<128x32xf32>
    %cst_5 = arith.constant 0.000000e+00 : f32
    %6 = vector.broadcast %cst_5 : f32 to vector<128x32xf32>
    %7 = arith.cmpf ogt, %5, %6 : vector<128x32xf32>
    %cst_6 = arith.constant 2.000000e-01 : f32
    %8 = vector.broadcast %cst_6 : f32 to vector<128x32xf32>
    %9 = arith.mulf %8, %5 : vector<128x32xf32>
    %10 = arith.select %7, %5, %9 : vector<128x32xi1>, vector<128x32xf32>
    %c0_7 = arith.constant 0 : index
    %c0_8 = arith.constant 0 : index
    %11 = vector.load %arg4[%c0_7, %c0_8] : memref<32x32xf32, #tpu.memory_space<vmem>>, vector<32x32xf32>
    %cst_9 = arith.constant dense<0.000000e+00> : vector<128x32xf32>
    %12 = tpu.matmul %10, %11, %cst_9 {dimension_numbers = #tpu.dot_dimension_numbers<[1], [0], [0], [1], [0, 0, 1, 1], [], []>} : vector<128x32xf32>, vector<32x32xf32>, vector<128x32xf32> -> vector<128x32xf32>
    %c0_10 = arith.constant 0 : index
    %c0_11 = arith.constant 0 : index
    %13 = vector.load %arg5[%c0_10, %c0_11] : memref<1x32xf32, #tpu.memory_space<vmem>>, vector<1x32xf32>
    %14 = vector.broadcast %13 : vector<1x32xf32> to vector<128x32xf32>
    %15 = arith.addf %12, %14 : vector<128x32xf32>
    %cst_12 = arith.constant 0.000000e+00 : f32
    %16 = vector.broadcast %cst_12 : f32 to vector<128x32xf32>
    %17 = arith.cmpf ogt, %15, %16 : vector<128x32xf32>
    %cst_13 = arith.constant 2.000000e-01 : f32
    %18 = vector.broadcast %cst_13 : f32 to vector<128x32xf32>
    %19 = arith.mulf %18, %15 : vector<128x32xf32>
    %20 = arith.select %17, %15, %19 : vector<128x32xi1>, vector<128x32xf32>
    %c0_14 = arith.constant 0 : index
    %c0_15 = arith.constant 0 : index
    %21 = vector.load %arg6[%c0_14, %c0_15] : memref<32x32xf32, #tpu.memory_space<vmem>>, vector<32x32xf32>
    %cst_16 = arith.constant dense<0.000000e+00> : vector<128x32xf32>
    %22 = tpu.matmul %20, %21, %cst_16 {dimension_numbers = #tpu.dot_dimension_numbers<[1], [0], [0], [1], [0, 0, 1, 1], [], []>} : vector<128x32xf32>, vector<32x32xf32>, vector<128x32xf32> -> vector<128x32xf32>
    %c0_17 = arith.constant 0 : index
    %c0_18 = arith.constant 0 : index
    %23 = vector.load %arg7[%c0_17, %c0_18] : memref<1x32xf32, #tpu.memory_space<vmem>>, vector<1x32xf32>
    %24 = vector.broadcast %23 : vector<1x32xf32> to vector<128x32xf32>
    %25 = arith.addf %22, %24 : vector<128x32xf32>
    %cst_19 = arith.constant 0.000000e+00 : f32
    %26 = vector.broadcast %cst_19 : f32 to vector<128x32xf32>
    %27 = arith.cmpf ogt, %25, %26 : vector<128x32xf32>
    %cst_20 = arith.constant 2.000000e-01 : f32
    %28 = vector.broadcast %cst_20 : f32 to vector<128x32xf32>
    %29 = arith.mulf %28, %25 : vector<128x32xf32>
    %30 = arith.select %27, %25, %29 : vector<128x32xi1>, vector<128x32xf32>
    %c0_21 = arith.constant 0 : index
    %c0_22 = arith.constant 0 : index
    %31 = vector.load %arg8[%c0_21, %c0_22] : memref<1x32xf32, #tpu.memory_space<vmem>>, vector<1x32xf32>
    %cst_23 = arith.constant dense<0.000000e+00> : vector<1x128xf32>
    %32 = tpu.matmul %31, %30, %cst_23 {dimension_numbers = #tpu.dot_dimension_numbers<[1], [1], [0], [0], [0, 0, 1, 0], [], []>} : vector<1x32xf32>, vector<128x32xf32>, vector<1x128xf32> -> vector<1x128xf32>
    %c0_24 = arith.constant 0 : index
    %c0_25 = arith.constant 0 : index
    %33 = vector.load %arg9[%c0_24, %c0_25] : memref<1x1xf32, #tpu.memory_space<vmem>>, vector<1x1xf32>
    %34 = vector.broadcast %33 : vector<1x1xf32> to vector<1x128xf32>
    %35 = arith.addf %32, %34 : vector<1x128xf32>
    %36 = arith.negf %35 : vector<1x128xf32>
    %37 = math.exp %36 : vector<1x128xf32>
    %cst_26 = arith.constant 1.000000e+00 : f32
    %38 = vector.broadcast %cst_26 : f32 to vector<1x128xf32>
    %39 = arith.addf %38, %37 : vector<1x128xf32>
    %40 = arith.divf %38, %39 : vector<1x128xf32>
    %c0_27 = arith.constant 0 : index
    %c0_28 = arith.constant 0 : index
    %41 = vector.load %arg10[%c0_27, %c0_28] : memref<1x128xf32, #tpu.memory_space<vmem>>, vector<1x128xf32>
    tpu.vector_store %arg10[%c0_27, %c0_28], %40 {strides = array<i32>} : memref<1x128xf32, #tpu.memory_space<vmem>>, vector<1x128xf32>,
    return
  }
  func.func @transform_0(%arg0: i32) -> (i32, i32) {
    %c0_i32 = arith.constant 0 : i32
    %c0_i32_0 = arith.constant 0 : i32
    return %arg0, %c0_i32 : i32, i32
  }
  func.func @transform_1(%arg0: i32) -> (i32, i32) {
    %c0_i32 = arith.constant 0 : i32
    %c0_i32_0 = arith.constant 0 : i32
    %c0_i32_1 = arith.constant 0 : i32
    return %c0_i32, %c0_i32_0 : i32, i32
  }
  func.func @transform_2(%arg0: i32) -> (i32, i32) {
    %c0_i32 = arith.constant 0 : i32
    %c0_i32_0 = arith.constant 0 : i32
    %c0_i32_1 = arith.constant 0 : i32
    return %c0_i32, %c0_i32_0 : i32, i32
  }
  func.func @transform_3(%arg0: i32) -> (i32, i32) {
    %c0_i32 = arith.constant 0 : i32
    %c0_i32_0 = arith.constant 0 : i32
    %c0_i32_1 = arith.constant 0 : i32
    return %c0_i32, %c0_i32_0 : i32, i32
  }
  func.func @transform_4(%arg0: i32) -> (i32, i32) {
    %c0_i32 = arith.constant 0 : i32
    %c0_i32_0 = arith.constant 0 : i32
    %c0_i32_1 = arith.constant 0 : i32
    return %c0_i32, %c0_i32_0 : i32, i32
  }
  func.func @transform_5(%arg0: i32) -> (i32, i32) {
    %c0_i32 = arith.constant 0 : i32
    %c0_i32_0 = arith.constant 0 : i32
    %c0_i32_1 = arith.constant 0 : i32
    return %c0_i32, %c0_i32_0 : i32, i32
  }
  func.func @transform_6(%arg0: i32) -> (i32, i32) {
    %c0_i32 = arith.constant 0 : i32
    %c0_i32_0 = arith.constant 0 : i32
    %c0_i32_1 = arith.constant 0 : i32
    return %c0_i32, %c0_i32_0 : i32, i32
  }
  func.func @transform_7(%arg0: i32) -> (i32, i32) {
    %c0_i32 = arith.constant 0 : i32
    %c0_i32_0 = arith.constant 0 : i32
    %c0_i32_1 = arith.constant 0 : i32
    return %c0_i32, %c0_i32_0 : i32, i32
  }
  func.func @transform_8(%arg0: i32) -> (i32, i32) {
    %c0_i32 = arith.constant 0 : i32
    %c0_i32_0 = arith.constant 0 : i32
    %c0_i32_1 = arith.constant 0 : i32
    return %c0_i32, %c0_i32_0 : i32, i32
  }
  func.func @transform_9(%arg0: i32) -> (i32, i32) {
    %c0_i32 = arith.constant 0 : i32
    %c0_i32_0 = arith.constant 0 : i32
    return %c0_i32, %arg0 : i32, i32
  }
}

</mosaic_0001>

<llo_original>
// kernel: tpu_custom_call.1
$region0: #{tpu_custom_call.1}
  #allocation0 [shape = 'u32[]', space=smem, size = 0x4, offset = 0x4, fixed_abs, tag = 'smem constant byte address 0x4 - core index']
  #allocation1 [shape = 'u32[72,128]{1,0:T(1,128)}', space=vmem, size = 0x9000, scoped, tag = 'internal scratch']
  #allocation2 [shape = 'f32[1,1]{1,0:T(1,128)S(1)}', space=vmem, size = 0x200, scoped, tag = 'scoped memory for tpu_custom_call.1']
  %s0 = inlined_call_operand.vmem [shape: f32[128,16], index: 0, kind: input, shape index: {}]
  %s1 = inlined_call_operand.vmem [shape: f32[16,32], index: 1, kind: input, shape index: {}]
  %s2 = inlined_call_operand.vmem [shape: f32[1,32], index: 2, kind: input, shape index: {}]
  %s3 = inlined_call_operand.vmem [shape: f32[32,32], index: 3, kind: input, shape index: {}]
  %s4 = inlined_call_operand.vmem [shape: f32[1,32], index: 4, kind: input, shape index: {}]
  %s5 = inlined_call_operand.vmem [shape: f32[32,32], index: 5, kind: input, shape index: {}]
  %s6 = inlined_call_operand.vmem [shape: f32[1,32], index: 6, kind: input, shape index: {}]
  %s7 = inlined_call_operand.vmem [shape: f32[1,32], index: 7, kind: input, shape index: {}]
  %s8 = inlined_call_operand.<no memory space> [shape: f32[1,1], index: 8, kind: input, shape index: {}]
  %s9 = inlined_call_operand.hbm [shape: f32[1,128], index: 9, kind: output, shape index: {}]
  %s10 = sld [smem:[#allocation0]]
  $region46: #{tpu_custom_call.1} parent=0
    _
  %s12 = ssub.s32 1, %s10
  %s13 = scalar_select 0, %s12, %s10
  %v14 = vstv %s8
  %15 = vst [vmem:[#allocation2] sm:$0x1] %v14
  $region1: #{tpu_custom_call.1} parent=0
    #allocation3 [shape = 'u8[512]{0}', space=vmem, size = 0x400, scoped, tag = 'output window, operand 0, single buffered']
    #allocation4 [shape = 's32[1]{0}', space=sflag, size = 0x4, scoped, tag = 'scoped memory for tpu_custom_call.1']
    %16 = vsyncpa [#allocation4], 0
    // Predicated region
    $region2: #{tpu_custom_call.1} parent=1 // pred_check
      _
    $region3: #{tpu_custom_call.1} parent=1 // pred_check_branch
      %18 = sbr.rel (0) target = $region5
    $region4: #{tpu_custom_call.1} parent=1 // pred_region
      _
    $region5: #{tpu_custom_call.1} parent=1 // pred_fallthru
      _
    // Predicated region
    $region6: #{tpu_custom_call.1} parent=1 // pred_check
      _
    $region7: #{tpu_custom_call.1} parent=1 // pred_check_branch
      %20 = sbr.rel (0) target = $region9
    $region8: #{tpu_custom_call.1} parent=1 // pred_region
      _
    $region9: #{tpu_custom_call.1} parent=1 // pred_fallthru
      _
    // Predicated region
    $region10: #{tpu_custom_call.1} parent=1 // pred_check
      _
    $region11: #{tpu_custom_call.1} parent=1 // pred_check_branch
      %22 = sbr.rel (0) target = $region13
    $region12: #{tpu_custom_call.1} parent=1 // pred_region
      _
    $region13: #{tpu_custom_call.1} parent=1 // pred_fallthru
      _
    // Predicated region
    $region14: #{tpu_custom_call.1} parent=1 // pred_check
      _
    $region15: #{tpu_custom_call.1} parent=1 // pred_check_branch
      %24 = sbr.rel (0) target = $region17
    $region16: #{tpu_custom_call.1} parent=1 // pred_region
      _
    $region17: #{tpu_custom_call.1} parent=1 // pred_fallthru
      _
    // Predicated region
    $region18: #{tpu_custom_call.1} parent=1 // pred_check
      _
    $region19: #{tpu_custom_call.1} parent=1 // pred_check_branch
      %26 = sbr.rel (0) target = $region21
    $region20: #{tpu_custom_call.1} parent=1 // pred_region
      _
    $region21: #{tpu_custom_call.1} parent=1 // pred_fallthru
      _
    // Predicated region
    $region22: #{tpu_custom_call.1} parent=1 // pred_check
      _
    $region23: #{tpu_custom_call.1} parent=1 // pred_check_branch
      %28 = sbr.rel (0) target = $region25
    $region24: #{tpu_custom_call.1} parent=1 // pred_region
      _
    $region25: #{tpu_custom_call.1} parent=1 // pred_fallthru
      _
    // Predicated region
    $region26: #{tpu_custom_call.1} parent=1 // pred_check
      _
    $region27: #{tpu_custom_call.1} parent=1 // pred_check_branch
      %30 = sbr.rel (0) target = $region29
    $region28: #{tpu_custom_call.1} parent=1 // pred_region
      _
    $region29: #{tpu_custom_call.1} parent=1 // pred_fallthru
      _
    // Predicated region
    $region30: #{tpu_custom_call.1} parent=1 // pred_check
      _
    $region31: #{tpu_custom_call.1} parent=1 // pred_check_branch
      %32 = sbr.rel (0) target = $region33
    $region32: #{tpu_custom_call.1} parent=1 // pred_region
      _
    $region33: #{tpu_custom_call.1} parent=1 // pred_fallthru
      _
    // Predicated region
    $region34: #{tpu_custom_call.1} parent=1 // pred_check
      _
    $region35: #{tpu_custom_call.1} parent=1 // pred_check_branch
      %34 = sbr.rel (0) target = $region37
    $region36: #{tpu_custom_call.1} parent=1 // pred_region
      _
    $region37: #{tpu_custom_call.1} parent=1 // pred_fallthru
      _
    %v35 = vld [vmem:[%s0] sm:$0xff]
    %v36 = vld [vmem:[%s0 + $0x8] sm:$0xff]
    %v37 = vld [vmem:[%s0 + $0x10] sm:$0xff]
    %v38 = vld [vmem:[%s0 + $0x18] sm:$0xff]
    %v39 = vld [vmem:[%s0 + $0x20] sm:$0xff]
    %v40 = vld [vmem:[%s0 + $0x28] sm:$0xff]
    %v41 = vld [vmem:[%s0 + $0x30] sm:$0xff]
    %v42 = vld [vmem:[%s0 + $0x38] sm:$0xff]
    %v43 = vld [vmem:[%s0 + $0x40] sm:$0xff]
    %v44 = vld [vmem:[%s0 + $0x48] sm:$0xff]
    %v45 = vld [vmem:[%s0 + $0x50] sm:$0xff]
    %v46 = vld [vmem:[%s0 + $0x58] sm:$0xff]
    %v47 = vld [vmem:[%s0 + $0x60] sm:$0xff]
    %v48 = vld [vmem:[%s0 + $0x68] sm:$0xff]
    %v49 = vld [vmem:[%s0 + $0x70] sm:$0xff]
    %v50 = vld [vmem:[%s0 + $0x78] sm:$0xff]
    %v51 = vld [vmem:[%s1] sm:$0xff]
    %v52 = vld [vmem:[%s1 + $0x8] sm:$0xff]
    %v53 = vld [vmem:[%s2] sm:$0x1]
    %v55 = vperm.slane %v53, 0
    %vm57 = vcmask 130048
    %v59 = vsel %vm57, %v35, 0
    %v62 = vsel %vm57, %v36, 0
    %v65 = vsel %vm57, %v37, 0
    %v68 = vsel %vm57, %v38, 0
    %v71 = vsel %vm57, %v39, 0
    %v74 = vsel %vm57, %v40, 0
    %v77 = vsel %vm57, %v41, 0
    %v80 = vsel %vm57, %v42, 0
    %v83 = vsel %vm57, %v43, 0
    %v86 = vsel %vm57, %v44, 0
    %v89 = vsel %vm57, %v45, 0
    %v92 = vsel %vm57, %v46, 0
    %v95 = vsel %vm57, %v47, 0
    %v98 = vsel %vm57, %v48, 0
    %v101 = vsel %vm57, %v49, 0
    %v104 = vsel %vm57, %v50, 0
    %106 = vmatpush.msra.mxu0 0.0
    %107 = vmatpush.msra.mxu0 0.0
    %108 = vmatpush.msra.mxu0 0.0
    %109 = vmatpush.msra.mxu0 0.0
    %110 = vmatpush.msra.mxu0 0.0
    %111 = vmatpush.msra.mxu0 0.0
    %112 = vmatpush.msra.mxu0 0.0
    %113 = vmatpush.msra.mxu0 0.0
    %114 = vmatpush.msra.mxu0 0.0
    %115 = vmatpush.msra.mxu0 0.0
    %116 = vmatpush.msra.mxu0 0.0
    %117 = vmatpush.msra.mxu0 0.0
    %118 = vmatpush.msra.mxu0 0.0
    %119 = vmatpush.msra.mxu0 0.0
    %120 = vmatpush.msra.mxu0 %v52
    %121 = vmatpush.msra.mxu0 %v51
    %122 = vmatmul.f32.gmra.mxu0 %v59
    %v123 = vpop.f32.mrf.mxu0
    %v124 = vadd.f32 %v55, %v123
    %125 = vmatmul.f32.gmra.mxu0 %v62
    %v126 = vpop.f32.mrf.mxu0
    %v127 = vadd.f32 %v55, %v126
    %128 = vmatmul.f32.gmra.mxu0 %v65
    %v129 = vpop.f32.mrf.mxu0
    %v130 = vadd.f32 %v55, %v129
    %131 = vmatmul.f32.gmra.mxu0 %v68
    %v132 = vpop.f32.mrf.mxu0
    %v133 = vadd.f32 %v55, %v132
    %134 = vmatmul.f32.gmra.mxu0 %v71
    %v135 = vpop.f32.mrf.mxu0
    %v136 = vadd.f32 %v55, %v135
    %137 = vmatmul.f32.gmra.mxu0 %v74
    %v138 = vpop.f32.mrf.mxu0
    %v139 = vadd.f32 %v55, %v138
    %140 = vmatmul.f32.gmra.mxu0 %v77
    %v141 = vpop.f32.mrf.mxu0
    %v142 = vadd.f32 %v55, %v141
    %143 = vmatmul.f32.gmra.mxu0 %v80
    %v144 = vpop.f32.mrf.mxu0
    %v145 = vadd.f32 %v55, %v144
    %146 = vmatmul.f32.gmra.mxu0 %v83
    %v147 = vpop.f32.mrf.mxu0
    %v148 = vadd.f32 %v55, %v147
    %149 = vmatmul.f32.gmra.mxu0 %v86
    %v150 = vpop.f32.mrf.mxu0
    %v151 = vadd.f32 %v55, %v150
    %152 = vmatmul.f32.gmra.mxu0 %v89
    %v153 = vpop.f32.mrf.mxu0
    %v154 = vadd.f32 %v55, %v153
    %155 = vmatmul.f32.gmra.mxu0 %v92
    %v156 = vpop.f32.mrf.mxu0
    %v157 = vadd.f32 %v55, %v156
    %158 = vmatmul.f32.gmra.mxu0 %v95
    %v159 = vpop.f32.mrf.mxu0
    %v160 = vadd.f32 %v55, %v159
    %161 = vmatmul.f32.gmra.mxu0 %v98
    %v162 = vpop.f32.mrf.mxu0
    %v163 = vadd.f32 %v55, %v162
    %164 = vmatmul.f32.gmra.mxu0 %v101
    %v165 = vpop.f32.mrf.mxu0
    %v166 = vadd.f32 %v55, %v165
    %167 = vmatmul.f32.gmra.mxu0 %v104
    %v168 = vpop.f32.mrf.mxu0
    %v169 = vadd.f32 %v55, %v168
    %170 = vdwg.mxu0
    %vm171 = vcmp.gt.f32.partialorder %v124, 0.0
    %vm172 = vcmp.gt.f32.partialorder %v127, 0.0
    %vm173 = vcmp.gt.f32.partialorder %v130, 0.0
    %vm174 = vcmp.gt.f32.partialorder %v133, 0.0
    %vm175 = vcmp.gt.f32.partialorder %v136, 0.0
    %vm176 = vcmp.gt.f32.partialorder %v139, 0.0
    %vm177 = vcmp.gt.f32.partialorder %v142, 0.0
    %vm178 = vcmp.gt.f32.partialorder %v145, 0.0
    %vm179 = vcmp.gt.f32.partialorder %v148, 0.0
    %vm180 = vcmp.gt.f32.partialorder %v151, 0.0
    %vm181 = vcmp.gt.f32.partialorder %v154, 0.0
    %vm182 = vcmp.gt.f32.partialorder %v157, 0.0
    %vm183 = vcmp.gt.f32.partialorder %v160, 0.0
    %vm184 = vcmp.gt.f32.partialorder %v163, 0.0
    %vm185 = vcmp.gt.f32.partialorder %v166, 0.0
    %vm186 = vcmp.gt.f32.partialorder %v169, 0.0
    %v187 = vmul.f32 %v124, 0.2
    %v188 = vmul.f32 %v127, 0.2
    %v189 = vmul.f32 %v130, 0.2
    %v190 = vmul.f32 %v133, 0.2
    %v191 = vmul.f32 %v136, 0.2
    %v192 = vmul.f32 %v139, 0.2
    %v193 = vmul.f32 %v142, 0.2
    %v194 = vmul.f32 %v145, 0.2
    %v195 = vmul.f32 %v148, 0.2
    %v196 = vmul.f32 %v151, 0.2
    %v197 = vmul.f32 %v154, 0.2
    %v198 = vmul.f32 %v157, 0.2
    %v199 = vmul.f32 %v160, 0.2
    %v200 = vmul.f32 %v163, 0.2
    %v201 = vmul.f32 %v166, 0.2
    %v202 = vmul.f32 %v169, 0.2
    %v203 = vsel %vm171, %v124, %v187
    %v204 = vsel %vm172, %v127, %v188
    %v205 = vsel %vm173, %v130, %v189
    %v206 = vsel %vm174, %v133, %v190
    %v207 = vsel %vm175, %v136, %v191
    %v208 = vsel %vm176, %v139, %v192
    %v209 = vsel %vm177, %v142, %v193
    %v210 = vsel %vm178, %v145, %v194
    %v211 = vsel %vm179, %v148, %v195
    %v212 = vsel %vm180, %v151, %v196
    %v213 = vsel %vm181, %v154, %v197
    %v214 = vsel %vm182, %v157, %v198
    %v215 = vsel %vm183, %v160, %v199
    %v216 = vsel %vm184, %v163, %v200
    %v217 = vsel %vm185, %v166, %v201
    %v218 = vsel %vm186, %v169, %v202
    %v219 = vld [vmem:[%s3] sm:$0xff]
    %v220 = vld [vmem:[%s3 + $0x8] sm:$0xff]
    %v221 = vld [vmem:[%s3 + $0x10] sm:$0xff]
    %v222 = vld [vmem:[%s3 + $0x18] sm:$0xff]
    %v223 = vld [vmem:[%s4] sm:$0x1]
    %v225 = vperm.slane %v223, 0
    %vm227 = vcmask 261120
    %v229 = vsel %vm227, %v203, 0
    %v232 = vsel %vm227, %v204, 0
    %v235 = vsel %vm227, %v205, 0
    %v238 = vsel %vm227, %v206, 0
    %v241 = vsel %vm227, %v207, 0
    %v244 = vsel %vm227, %v208, 0
    %v247 = vsel %vm227, %v209, 0
    %v250 = vsel %vm227, %v210, 0
    %v253 = vsel %vm227, %v211, 0
    %v256 = vsel %vm227, %v212, 0
    %v259 = vsel %vm227, %v213, 0
    %v262 = vsel %vm227, %v214, 0
    %v265 = vsel %vm227, %v215, 0
    %v268 = vsel %vm227, %v216, 0
    %v271 = vsel %vm227, %v217, 0
    %v274 = vsel %vm227, %v218, 0
    %276 = vmatpush.msra.mxu0 0.0
    %277 = vmatpush.msra.mxu0 0.0
    %278 = vmatpush.msra.mxu0 0.0
    %279 = vmatpush.msra.mxu0 0.0
    %280 = vmatpush.msra.mxu0 0.0
    %281 = vmatpush.msra.mxu0 0.0
    %282 = vmatpush.msra.mxu0 0.0
    %283 = vmatpush.msra.mxu0 0.0
    %284 = vmatpush.msra.mxu0 0.0
    %285 = vmatpush.msra.mxu0 0.0
    %286 = vmatpush.msra.mxu0 0.0
    %287 = vmatpush.msra.mxu0 0.0
    %288 = vmatpush.msra.mxu0 %v222
    %289 = vmatpush.msra.mxu0 %v221
    %290 = vmatpush.msra.mxu0 %v220
    %291 = vmatpush.msra.mxu0 %v219
    %292 = vmatmul.f32.gmra.mxu0 %v229
    %v293 = vpop.f32.mrf.mxu0
    %v294 = vadd.f32 %v225, %v293
    %295 = vmatmul.f32.gmra.mxu0 %v232
    %v296 = vpop.f32.mrf.mxu0
    %v297 = vadd.f32 %v225, %v296
    %298 = vmatmul.f32.gmra.mxu0 %v235
    %v299 = vpop.f32.mrf.mxu0
    %v300 = vadd.f32 %v225, %v299
    %301 = vmatmul.f32.gmra.mxu0 %v238
    %v302 = vpop.f32.mrf.mxu0
    %v303 = vadd.f32 %v225, %v302
    %304 = vmatmul.f32.gmra.mxu0 %v241
    %v305 = vpop.f32.mrf.mxu0
    %v306 = vadd.f32 %v225, %v305
    %307 = vmatmul.f32.gmra.mxu0 %v244
    %v308 = vpop.f32.mrf.mxu0
    %v309 = vadd.f32 %v225, %v308
    %310 = vmatmul.f32.gmra.mxu0 %v247
    %v311 = vpop.f32.mrf.mxu0
    %v312 = vadd.f32 %v225, %v311
    %313 = vmatmul.f32.gmra.mxu0 %v250
    %v314 = vpop.f32.mrf.mxu0
    %v315 = vadd.f32 %v225, %v314
    %316 = vmatmul.f32.gmra.mxu0 %v253
    %v317 = vpop.f32.mrf.mxu0
    %v318 = vadd.f32 %v225, %v317
    %319 = vmatmul.f32.gmra.mxu0 %v256
    %v320 = vpop.f32.mrf.mxu0
    %v321 = vadd.f32 %v225, %v320
    %322 = vmatmul.f32.gmra.mxu0 %v259
    %v323 = vpop.f32.mrf.mxu0
    %v324 = vadd.f32 %v225, %v323
    %325 = vmatmul.f32.gmra.mxu0 %v262
    %v326 = vpop.f32.mrf.mxu0
    %v327 = vadd.f32 %v225, %v326
    %328 = vmatmul.f32.gmra.mxu0 %v265
    %v329 = vpop.f32.mrf.mxu0
    %v330 = vadd.f32 %v225, %v329
    %331 = vmatmul.f32.gmra.mxu0 %v268
    %v332 = vpop.f32.mrf.mxu0
    %v333 = vadd.f32 %v225, %v332
    %334 = vmatmul.f32.gmra.mxu0 %v271
    %v335 = vpop.f32.mrf.mxu0
    %v336 = vadd.f32 %v225, %v335
    %337 = vmatmul.f32.gmra.mxu0 %v274
    %v338 = vpop.f32.mrf.mxu0
    %v339 = vadd.f32 %v225, %v338
    %340 = vdwg.mxu0
    %vm341 = vcmp.gt.f32.partialorder %v294, 0.0
    %vm342 = vcmp.gt.f32.partialorder %v297, 0.0
    %vm343 = vcmp.gt.f32.partialorder %v300, 0.0
    %vm344 = vcmp.gt.f32.partialorder %v303, 0.0
    %vm345 = vcmp.gt.f32.partialorder %v306, 0.0
    %vm346 = vcmp.gt.f32.partialorder %v309, 0.0
    %vm347 = vcmp.gt.f32.partialorder %v312, 0.0
    %vm348 = vcmp.gt.f32.partialorder %v315, 0.0
    %vm349 = vcmp.gt.f32.partialorder %v318, 0.0
    %vm350 = vcmp.gt.f32.partialorder %v321, 0.0
    %vm351 = vcmp.gt.f32.partialorder %v324, 0.0
    %vm352 = vcmp.gt.f32.partialorder %v327, 0.0
    %vm353 = vcmp.gt.f32.partialorder %v330, 0.0
    %vm354 = vcmp.gt.f32.partialorder %v333, 0.0
    %vm355 = vcmp.gt.f32.partialorder %v336, 0.0
    %vm356 = vcmp.gt.f32.partialorder %v339, 0.0
    %v357 = vmul.f32 %v294, 0.2
    %v358 = vmul.f32 %v297, 0.2
    %v359 = vmul.f32 %v300, 0.2
    %v360 = vmul.f32 %v303, 0.2
    %v361 = vmul.f32 %v306, 0.2
    %v362 = vmul.f32 %v309, 0.2
    %v363 = vmul.f32 %v312, 0.2
    %v364 = vmul.f32 %v315, 0.2
    %v365 = vmul.f32 %v318, 0.2
    %v366 = vmul.f32 %v321, 0.2
    %v367 = vmul.f32 %v324, 0.2
    %v368 = vmul.f32 %v327, 0.2
    %v369 = vmul.f32 %v330, 0.2
    %v370 = vmul.f32 %v333, 0.2
    %v371 = vmul.f32 %v336, 0.2
    %v372 = vmul.f32 %v339, 0.2
    %v373 = vsel %vm341, %v294, %v357
    %v374 = vsel %vm342, %v297, %v358
    %v375 = vsel %vm343, %v300, %v359
    %v376 = vsel %vm344, %v303, %v360
    %v377 = vsel %vm345, %v306, %v361
    %v378 = vsel %vm346, %v309, %v362
    %v379 = vsel %vm347, %v312, %v363
    %v380 = vsel %vm348, %v315, %v364
    %v381 = vsel %vm349, %v318, %v365
    %v382 = vsel %vm350, %v321, %v366
    %v383 = vsel %vm351, %v324, %v367
    %v384 = vsel %vm352, %v327, %v368
    %v385 = vsel %vm353, %v330, %v369
    %v386 = vsel %vm354, %v333, %v370
    %v387 = vsel %vm355, %v336, %v371
    %v388 = vsel %vm356, %v339, %v372
    %v389 = vld [vmem:[%s5] sm:$0xff]
    %v390 = vld [vmem:[%s5 + $0x8] sm:$0xff]
    %v391 = vld [vmem:[%s5 + $0x10] sm:$0xff]
    %v392 = vld [vmem:[%s5 + $0x18] sm:$0xff]
    %v393 = vld [vmem:[%s6] sm:$0x1]
    %v395 = vperm.slane %v393, 0
    %v398 = vsel %vm227, %v373, 0
    %v401 = vsel %vm227, %v374, 0
    %v404 = vsel %vm227, %v375, 0
    %v407 = vsel %vm227, %v376, 0
    %v410 = vsel %vm227, %v377, 0
    %v413 = vsel %vm227, %v378, 0
    %v416 = vsel %vm227, %v379, 0
    %v419 = vsel %vm227, %v380, 0
    %v422 = vsel %vm227, %v381, 0
    %v425 = vsel %vm227, %v382, 0
    %v428 = vsel %vm227, %v383, 0
    %v431 = vsel %vm227, %v384, 0
    %v434 = vsel %vm227, %v385, 0
    %v437 = vsel %vm227, %v386, 0
    %v440 = vsel %vm227, %v387, 0
    %v443 = vsel %vm227, %v388, 0
    %445 = vmatpush.msra.mxu0 0.0
    %446 = vmatpush.msra.mxu0 0.0
    %447 = vmatpush.msra.mxu0 0.0
    %448 = vmatpush.msra.mxu0 0.0
    %449 = vmatpush.msra.mxu0 0.0
    %450 = vmatpush.msra.mxu0 0.0
    %451 = vmatpush.msra.mxu0 0.0
    %452 = vmatpush.msra.mxu0 0.0
    %453 = vmatpush.msra.mxu0 0.0
    %454 = vmatpush.msra.mxu0 0.0
    %455 = vmatpush.msra.mxu0 0.0
    %456 = vmatpush.msra.mxu0 0.0
    %457 = vmatpush.msra.mxu0 %v392
    %458 = vmatpush.msra.mxu0 %v391
    %459 = vmatpush.msra.mxu0 %v390
    %460 = vmatpush.msra.mxu0 %v389
    %461 = vmatmul.f32.gmra.mxu0 %v398
    %v462 = vpop.f32.mrf.mxu0
    %v463 = vadd.f32 %v395, %v462
    %464 = vmatmul.f32.gmra.mxu0 %v401
    %v465 = vpop.f32.mrf.mxu0
    %v466 = vadd.f32 %v395, %v465
    %467 = vmatmul.f32.gmra.mxu0 %v404
    %v468 = vpop.f32.mrf.mxu0
    %v469 = vadd.f32 %v395, %v468
    %470 = vmatmul.f32.gmra.mxu0 %v407
    %v471 = vpop.f32.mrf.mxu0
    %v472 = vadd.f32 %v395, %v471
    %473 = vmatmul.f32.gmra.mxu0 %v410
    %v474 = vpop.f32.mrf.mxu0
    %v475 = vadd.f32 %v395, %v474
    %476 = vmatmul.f32.gmra.mxu0 %v413
    %v477 = vpop.f32.mrf.mxu0
    %v478 = vadd.f32 %v395, %v477
    %479 = vmatmul.f32.gmra.mxu0 %v416
    %v480 = vpop.f32.mrf.mxu0
    %v481 = vadd.f32 %v395, %v480
    %482 = vmatmul.f32.gmra.mxu0 %v419
    %v483 = vpop.f32.mrf.mxu0
    %v484 = vadd.f32 %v395, %v483
    %485 = vmatmul.f32.gmra.mxu0 %v422
    %v486 = vpop.f32.mrf.mxu0
    %v487 = vadd.f32 %v395, %v486
    %488 = vmatmul.f32.gmra.mxu0 %v425
    %v489 = vpop.f32.mrf.mxu0
    %v490 = vadd.f32 %v395, %v489
    %491 = vmatmul.f32.gmra.mxu0 %v428
    %v492 = vpop.f32.mrf.mxu0
    %v493 = vadd.f32 %v395, %v492
    %494 = vmatmul.f32.gmra.mxu0 %v431
    %v495 = vpop.f32.mrf.mxu0
    %v496 = vadd.f32 %v395, %v495
    %497 = vmatmul.f32.gmra.mxu0 %v434
    %v498 = vpop.f32.mrf.mxu0
    %v499 = vadd.f32 %v395, %v498
    %500 = vmatmul.f32.gmra.mxu0 %v437
    %v501 = vpop.f32.mrf.mxu0
    %v502 = vadd.f32 %v395, %v501
    %503 = vmatmul.f32.gmra.mxu0 %v440
    %v504 = vpop.f32.mrf.mxu0
    %v505 = vadd.f32 %v395, %v504
    %506 = vmatmul.f32.gmra.mxu0 %v443
    %v507 = vpop.f32.mrf.mxu0
    %v508 = vadd.f32 %v395, %v507
    %509 = vdwg.mxu0
    %vm510 = vcmp.gt.f32.partialorder %v463, 0.0
    %vm511 = vcmp.gt.f32.partialorder %v466, 0.0
    %vm512 = vcmp.gt.f32.partialorder %v469, 0.0
    %vm513 = vcmp.gt.f32.partialorder %v472, 0.0
    %vm514 = vcmp.gt.f32.partialorder %v475, 0.0
    %vm515 = vcmp.gt.f32.partialorder %v478, 0.0
    %vm516 = vcmp.gt.f32.partialorder %v481, 0.0
    %vm517 = vcmp.gt.f32.partialorder %v484, 0.0
    %vm518 = vcmp.gt.f32.partialorder %v487, 0.0
    %vm519 = vcmp.gt.f32.partialorder %v490, 0.0
    %vm520 = vcmp.gt.f32.partialorder %v493, 0.0
    %vm521 = vcmp.gt.f32.partialorder %v496, 0.0
    %vm522 = vcmp.gt.f32.partialorder %v499, 0.0
    %vm523 = vcmp.gt.f32.partialorder %v502, 0.0
    %vm524 = vcmp.gt.f32.partialorder %v505, 0.0
    %vm525 = vcmp.gt.f32.partialorder %v508, 0.0
    %v526 = vmul.f32 %v463, 0.2
    %v527 = vmul.f32 %v466, 0.2
    %v528 = vmul.f32 %v469, 0.2
    %v529 = vmul.f32 %v472, 0.2
    %v530 = vmul.f32 %v475, 0.2
    %v531 = vmul.f32 %v478, 0.2
    %v532 = vmul.f32 %v481, 0.2
    %v533 = vmul.f32 %v484, 0.2
    %v534 = vmul.f32 %v487, 0.2
    %v535 = vmul.f32 %v490, 0.2
    %v536 = vmul.f32 %v493, 0.2
    %v537 = vmul.f32 %v496, 0.2
    %v538 = vmul.f32 %v499, 0.2
    %v539 = vmul.f32 %v502, 0.2
    %v540 = vmul.f32 %v505, 0.2
    %v541 = vmul.f32 %v508, 0.2
    %v542 = vsel %vm510, %v463, %v526
    %v543 = vsel %vm511, %v466, %v527
    %v544 = vsel %vm512, %v469, %v528
    %v545 = vsel %vm513, %v472, %v529
    %v546 = vsel %vm514, %v475, %v530
    %v547 = vsel %vm515, %v478, %v531
    %v548 = vsel %vm516, %v481, %v532
    %v549 = vsel %vm517, %v484, %v533
    %v550 = vsel %vm518, %v487, %v534
    %v551 = vsel %vm519, %v490, %v535
    %v552 = vsel %vm520, %v493, %v536
    %v553 = vsel %vm521, %v496, %v537
    %v554 = vsel %vm522, %v499, %v538
    %v555 = vsel %vm523, %v502, %v539
    %v556 = vsel %vm524, %v505, %v540
    %v557 = vsel %vm525, %v508, %v541
    %v558 = vld [vmem:[%s7] sm:$0x1]
    %v559 = vld [vmem:[#allocation2] sm:$0x1]
    %561 = vset.pattern.permute.xlu0 0
    %562 = vperm.xlu0 %561, %v559
    %v563 = vpop.permute.xlu0 %562
    %v565 = vperm.slane %v563, 0
    %v567 = vsel %vm227, %v558, 0
    %v570 = vsel %vm227, %v542, 0
    %v573 = vsel %vm227, %v543, 0
    %v576 = vsel %vm227, %v544, 0
    %v579 = vsel %vm227, %v545, 0
    %v582 = vsel %vm227, %v546, 0
    %v585 = vsel %vm227, %v547, 0
    %v588 = vsel %vm227, %v548, 0
    %v591 = vsel %vm227, %v549, 0
    %v594 = vsel %vm227, %v550, 0
    %v597 = vsel %vm227, %v551, 0
    %v600 = vsel %vm227, %v552, 0
    %v603 = vsel %vm227, %v553, 0
    %v606 = vsel %vm227, %v554, 0
    %v609 = vsel %vm227, %v555, 0
    %v612 = vsel %vm227, %v556, 0
    %v615 = vsel %vm227, %v557, 0
    %617 = vmatpush.xpose.msra.mxu0 %v615
    %618 = vmatpush.xpose.msra.mxu0 %v612
    %619 = vmatpush.xpose.msra.mxu0 %v609
    %620 = vmatpush.xpose.msra.mxu0 %v606
    %621 = vmatpush.xpose.msra.mxu0 %v603
    %622 = vmatpush.xpose.msra.mxu0 %v600
    %623 = vmatpush.xpose.msra.mxu0 %v597
    %624 = vmatpush.xpose.msra.mxu0 %v594
    %625 = vmatpush.xpose.msra.mxu0 %v591
    %626 = vmatpush.xpose.msra.mxu0 %v588
    %627 = vmatpush.xpose.msra.mxu0 %v585
    %628 = vmatpush.xpose.msra.mxu0 %v582
    %629 = vmatpush.xpose.msra.mxu0 %v579
    %630 = vmatpush.xpose.msra.mxu0 %v576
    %631 = vmatpush.xpose.msra.mxu0 %v573
    %632 = vmatpush.xpose.msra.mxu0 %v570
    %633 = vmatmul.f32.gmra.mxu0 %v567
    %v634 = vpop.f32.mrf.mxu0
    %v635 = vadd.f32 %v565, %v634
    %636 = vdwg.mxu0
    %v637 = vxor.u32 %v635, 2147483648
    %v638 = vmul.f32 %v637, 1.442695
    %v639 = vpow.pop %v638
    %v640 = vadd.f32 %v639, 1.0
    %v641 = vrcp.pop %v640
    %v642 = vmul.f32 %v640, %v641
    %v643 = vsub.f32 1.0, %v642
    %v644 = vmul.f32 %v641, %v643
    %v645 = vadd.f32 %v641, %v644
    %vm646 = vweird.f32 %v640
    %vm647 = vweird.f32 %v641
    %vm648 = vmor %vm646, %vm647
    %v649 = vsel %vm648, %v641, %v645
    %v650 = vand.u32 2147483647, %v640
    %vm651 = vcmp.eq.f32.partialorder %v650, 8.507059e+37
    %v652 = vand.u32 %v640, 2147483648
    %v653 = vor.u32 1.1754944e-38, %v652
    %v654 = vsel %vm651, %v653, %v649
    %v655 = vmul.f32 1.0, %v654
    %656 = vst [vmem:[#allocation3] sm:$0x1] %v655
    // Predicated region
    $region38: #{tpu_custom_call.1} parent=1 // pred_check
      _
    $region39: #{tpu_custom_call.1} parent=1 // pred_check_branch
      %658 = sbr.rel (0) target = $region41
    $region40: #{tpu_custom_call.1} parent=1 // pred_region
      %660 = vsyncadd [#allocation4], 0
      %s662 = sshll.u32 [#allocation3], 4
      %s663 = int_to_ptr.vmem [resolvable:$true] %s662
      %s664 = sshll.u32 %s9, 4
      %s665 = int_to_ptr.hbm [resolvable:$true] %s664
      %667 = dma.vmem_to_hbm [thread:$0]  %s663, 16, %s665, [#allocation4]
    $region41: #{tpu_custom_call.1} parent=1 // pred_fallthru
      _
    // Predicated region
    $region42: #{tpu_custom_call.1} parent=1 // pred_check
      _
    $region43: #{tpu_custom_call.1} parent=1 // pred_check_branch
      %669 = sbr.rel (0) target = $region45
    $region44: #{tpu_custom_call.1} parent=1 // pred_region
      %671 = dma.done [#allocation4], 16
    $region45: #{tpu_custom_call.1} parent=1 // pred_fallthru
      _
    %672 = vsyncpa [#allocation4], 1

</llo_original>
